<compile_context>
chip_gen: v7x
topology: tpu7x:2x2x1
jax: 0.10.0
libtpu: 0.0.40
codegen_flags: <defaults>
</compile_context>

<pallas_src>
import functools

import jax
import jax.numpy as jnp
from jax.experimental import pallas as pl
from jax.experimental.pallas import tpu as pltpu


def _round_up(x, m):
    return -(-x // m) * m


def _sublane_multiple(itemsize):
    # f32 -> 8 rows per sublane tile, bf16 -> 16, int8/fp8 -> 32.
    return max(8, 32 // max(int(itemsize), 1))


def _padded_block_bytes(rows, cols, itemsize):
    """Padded VMEM footprint of one (rows, cols) tile."""
    return _round_up(rows, _sublane_multiple(itemsize)) * _round_up(cols, 128) * itemsize


def _vmem_capacity_bytes():
    """Physical VMEM per core; fall back to the smallest current part (v7x)."""
    try:
        return int(pltpu.get_tpu_info().vmem_capacity_bytes)
    except Exception:
        return 64 << 20


def _shift_kernel(x_ref, o_ref, *, bb, r, dwc):
    """out[b] = roll(roll(x[b], r, rows), dwc, lanes) per batch slice."""
    for b in range(bb):                     # static unroll; bb <= 8
        x = x_ref[b]                        # (th, WC)
        if r:
            x = pltpu.roll(x, r, axis=0)    # sublane roll (XLU slot)
        if dwc:
            x = pltpu.roll(x, dwc, axis=1)  # lane roll (XLU slot)
        o_ref[b] = x                        # one full-width store per slice


def _shift_kernel_seam(xa_ref, xb_ref, o_ref, *, bb, r, dwc):
    """H-tiled fallback: the output tile wraps across two input H-tiles.

    out[k] = A[th - r + k]  for k <  r   (rows that wrapped around)
           = B[k - r]       for k >= r
    == roll(M, r, rows) with M[j] = A[j] if j >= th - r else B[j]
    -> one select (VALU) + one sublane roll + one lane roll, full-width stores.
    """
    th, wc = xb_ref.shape[1], xb_ref.shape[2]
    take_a = jax.lax.broadcasted_iota(jnp.int32, (th, wc), 0) >= (th - r)
    for b in range(bb):
        x = jnp.where(take_a, xa_ref[b], xb_ref[b])
        x = pltpu.roll(x, r, axis=0)
        if dwc:
            x = pltpu.roll(x, dwc, axis=1)
        o_ref[b] = x


def cyclic_shift(x, displacement, *, block_budget_bytes=None, donate_input=False):
    """Pallas equivalent of CyclicShift(displacement)(x) for x of shape (B, H, W, C)."""
    B, H, W, C = x.shape
    dh = displacement % H        # normalizes negative shifts, like torch.roll
    dw = displacement % W
    WC = W * C
    dwc = dw * C                 # rolling the flat W*C axis by dw*C == rolling W by dw
    itemsize = jnp.dtype(x.dtype).itemsize
    xf = x.reshape(B, H, WC)     # lane-dense view; free reshape

    # ---- Per-generation VMEM budgeting (128 MiB v5e/v6e, 64 MiB v7x). ----
    cap = _vmem_capacity_bytes()
    vmem_limit = min(int(cap * 3 // 4), 100 << 20)
    if block_budget_bytes is None:
        # Worst case 3 views (2 in + 1 out) double-buffered = 6 live tiles;
        # stay well inside vmem_limit: ~12 MiB/tile on v5e/v6e, ~6 MiB on v7x.
        block_budget_bytes = vmem_limit // 8

    # ---- H tiling: full H if it fits, else the largest 8-aligned divisor. ----
    sub = _sublane_multiple(itemsize)
    one_batch_bytes = _padded_block_bytes(H, WC, itemsize)
    th = H
    if one_batch_bytes > block_budget_bytes:
        cands = [d for d in range(H - 1, 0, -1) if H % d == 0 and d % sub == 0]
        for d in cands:
            if _padded_block_bytes(d, WC, itemsize) <= block_budget_bytes:
                th = d
                break
        else:
            if cands:
                th = cands[-1]   # smallest aligned divisor; best effort
    nH = H // th
    q, r = divmod(dh, th)        # q -> DMA addressing (index_map); r -> XLU roll

    # ---- Batch fattening: multi-MB blocks, but >= 2 grid steps when B >= 2. --
    bb = 1
    if th == H:
        bb = max(1, min(B, block_budget_bytes // max(one_batch_bytes, 1), 8))
        if B >= 2:
            bb = min(bb, -(-B // 2))     # keep >= 2 batch steps for megacore
        bb = max(d for d in range(1, bb + 1) if B % d == 0)   # exact cover
    nb = B // bb

    two_views = (r > 0) and (nH > 1)
    block = (bb, th, WC)

    out_spec = pl.BlockSpec(block, lambda bi, hi: (bi, hi, 0))
    # Input H-block holding rows [r, th) of the output tile (always needed).
    b_spec = pl.BlockSpec(block, lambda bi, hi: (bi, (hi + nH - q) % nH, 0))
    if two_views:
        # Input H-block holding the r wrapped rows at the top of the output tile.
        a_spec = pl.BlockSpec(block, lambda bi, hi: (bi, (hi + nH - q - 1) % nH, 0))
        kernel = functools.partial(_shift_kernel_seam, bb=bb, r=r, dwc=dwc)
        in_specs, operands = [a_spec, b_spec], (xf, xf)
    else:
        kernel = functools.partial(_shift_kernel, bb=bb, r=r, dwc=dwc)
        in_specs, operands = [b_spec], (xf,)

    nbytes = B * H * WC * itemsize
    cost = pl.CostEstimate(flops=0, transcendentals=0,
                           bytes_accessed=(len(operands) + 1) * nbytes)

    extra = {}
    if donate_input and (not two_views) and q == 0:
        # Safe in-place: each step reads exactly the HBM block it later
        # overwrites, and the read lands in VMEM before the output DMA starts.
        extra["input_output_aliases"] = {0: 0}

    out = pl.pallas_call(
        kernel,
        out_shape=jax.ShapeDtypeStruct((B, H, WC), x.dtype),
        grid=(nb, nH),
        in_specs=in_specs,
        out_specs=out_spec,
        compiler_params=pltpu.CompilerParams(
            dimension_semantics=("parallel", "parallel"),
            vmem_limit_bytes=vmem_limit,
        ),
        cost_estimate=cost,
        **extra,
    )(*operands)
    return out.reshape(B, H, W, C)


if __name__ == "__main__":
    # Small swin-like feature map (B, H, W, C); W*C = 128 keeps stores lane-dense.
    B, H, W, C = 2, 16, 16, 8
    displacement = -3            # swin uses +/- window_size // 2

    key = jax.random.PRNGKey(0)
    x = jax.random.normal(key, (B, H, W, C), dtype=jnp.float32)
    ref = jnp.roll(x, shift=(displacement, displacement), axis=(1, 2))

    # Main path: full-H lane-dense blocks, H offset handled by q/r split.
    out = jax.block_until_ready(cyclic_shift(x, displacement))
    assert out.shape == x.shape and out.dtype == x.dtype
    assert jnp.array_equal(out, ref)

    # Positive displacement on the main path.
    out_pos = jax.block_until_ready(cyclic_shift(x, 5))
    assert jnp.array_equal(out_pos, jnp.roll(x, shift=(5, 5), axis=(1, 2)))

    # Forced H-tiled seam path (giant-feature-map fallback): budget only fits
    # an (8, 128) f32 tile -> th=8, q=1, r=5, two input views.
    out_seam = jax.block_until_ready(
        cyclic_shift(x, displacement, block_budget_bytes=4 << 10))
    assert jnp.array_equal(out_seam, ref)

    print("KERNEL_OK")
</pallas_src>

<mosaic_0001>
module attributes {stable_mosaic.version = 11 : i64} {
  func.func @_shift_kernel(%arg0: i32, %arg1: i32, %arg2: memref<1x16x128xf32, #tpu.memory_space<vmem>>, %arg3: memref<1x16x128xf32, #tpu.memory_space<vmem>>) attributes {dimension_semantics = [#tpu.dimension_semantics<parallel>, #tpu.dimension_semantics<parallel>], iteration_bounds = array<i64: 2, 1>, scalar_prefetch = 0 : i64, scratch_operands = 0 : i64, tpu.core_type = #tpu.core_type<tc>, window_params = [{transform_indices = @transform_0, window_bounds = array<i64: 1, 16, 128>}, {transform_indices = @transform_1, window_bounds = array<i64: 1, 16, 128>}]} {
    %c0 = arith.constant 0 : index
    %c0_0 = arith.constant 0 : index
    %c0_1 = arith.constant 0 : index
    %0 = vector.load %arg2[%c0, %c0_0, %c0_1] : memref<1x16x128xf32, #tpu.memory_space<vmem>>, vector<1x16x128xf32>
    %1 = vector.shape_cast %0 : vector<1x16x128xf32> to vector<16x128xf32>
    %c13_i32 = arith.constant 13 : i32
    %2 = tpu.dynamic_rotate %1 by %c13_i32 dim 0 : vector<16x128xf32>, i32 -> vector<16x128xf32>
    %c104_i32 = arith.constant 104 : i32
    %3 = tpu.dynamic_rotate %2 by %c104_i32 dim 1 : vector<16x128xf32>, i32 -> vector<16x128xf32>
    %c0_2 = arith.constant 0 : index
    %c0_3 = arith.constant 0 : index
    %c0_4 = arith.constant 0 : index
    %4 = vector.load %arg3[%c0_2, %c0_3, %c0_4] : memref<1x16x128xf32, #tpu.memory_space<vmem>>, vector<1x16x128xf32>
    %5 = vector.shape_cast %4 : vector<1x16x128xf32> to vector<16x128xf32>
    %6 = vector.shape_cast %3 : vector<16x128xf32> to vector<1x16x128xf32>
    tpu.vector_store %arg3[%c0_2, %c0_3, %c0_4], %6 {strides = array<i32>} : memref<1x16x128xf32, #tpu.memory_space<vmem>>, vector<1x16x128xf32>,
    return
  }
  func.func @transform_0(%arg0: i32, %arg1: i32) -> (i32, i32, i32) {
    %c1_i32 = arith.constant 1 : i32
    %0 = arith.addi %arg1, %c1_i32 : i32
    %c0_i32 = arith.constant 0 : i32
    %1 = arith.subi %0, %c0_i32 : i32
    %c1_i32_0 = arith.constant 1 : i32
    %c0_i32_1 = arith.constant 0 : i32
    %2 = arith.cmpi eq, %c1_i32_0, %c0_i32_1 : i32
    %c1_i32_2 = arith.constant 1 : i32
    %3 = arith.select %2, %c1_i32_2, %c1_i32_0 : i32
    %4 = arith.remsi %1, %3 : i32
    %c0_i32_3 = arith.constant 0 : i32
    %5 = arith.cmpi ne, %4, %c0_i32_3 : i32
    %c0_i32_4 = arith.constant 0 : i32
    %6 = arith.cmpi slt, %4, %c0_i32_4 : i32
    %c0_i32_5 = arith.constant 0 : i32
    %7 = arith.cmpi slt, %3, %c0_i32_5 : i32
    %8 = arith.xori %6, %7 : i1
    %9 = arith.andi %8, %5 : i1
    %10 = arith.addi %4, %3 : i32
    %11 = arith.select %9, %10, %4 : i32
    %c0_i32_6 = arith.constant 0 : i32
    %c0_i32_7 = arith.constant 0 : i32
    return %arg0, %11, %c0_i32_6 : i32, i32, i32
  }
  func.func @transform_1(%arg0: i32, %arg1: i32) -> (i32, i32, i32) {
    %c0_i32 = arith.constant 0 : i32
    %c0_i32_0 = arith.constant 0 : i32
    return %arg0, %arg1, %c0_i32 : i32, i32, i32
  }
}

</mosaic_0001>

<llo_original>
// kernel: tpu_custom_call.1
$region0: #{tpu_custom_call.1}
  #allocation0 [shape = 'u32[]', space=smem, size = 0x4, offset = 0x4, fixed_abs, tag = 'smem constant byte address 0x4 - core index']
  #allocation1 [shape = 'u32[144,128]{1,0:T(1,128)}', space=vmem, size = 0x12000, scoped, tag = 'internal scratch']
  %s0 = inlined_call_operand.hbm [shape: f32[2,16,128], index: 0, kind: input, shape index: {}]
  %s1 = inlined_call_operand.hbm [shape: f32[2,16,128], index: 1, kind: output, shape index: {}]
  %s2 = sld [smem:[#allocation0]]
  $region41: #{tpu_custom_call.1} parent=0
    _
  %s4 = ssub.s32 1, %s2
  %s5 = scalar_select 0, %s4, %s2
  $region1: #{tpu_custom_call.1} parent=0
    #allocation2 [shape = 'u8[16384]{0}', space=vmem, size = 0x4000, scoped, tag = 'input window, operand 0']
    #allocation3 [shape = 's32[2]{0}', space=sflag, size = 0x8, scoped, tag = 'scoped memory for tpu_custom_call.1']
    #allocation4 [shape = 's32[2]{0}', space=sflag, size = 0x8, scoped, tag = 'scoped memory for tpu_custom_call.1']
    #allocation5 [shape = 'u8[16384]{0}', space=vmem, size = 0x4000, scoped, tag = 'output window, operand 0']
    %6 = vsyncpa [#allocation3], 0
    %s7 = scalar_lea.sflag [#allocation3], 1
    %8 = vsyncpa %s7, 0
    %9 = vsyncpa [#allocation4], 0
    %s10 = scalar_lea.sflag [#allocation4], 1
    %11 = vsyncpa %s10, 0
    loop: start=0, step=1, limit=4
    $region2: #{tpu_custom_call.1} parent=1 // loop_pre_header
      _
    $region3: #{tpu_custom_call.1} parent=1 // loop_header
      %s13 = sphi 0, %s17
      %p14 = scmp.ge.s32.totalorder %s13, 4
      %s20 = sphi 0, %s32
      %s21 = sphi 0, %s28
      %s22 = sphi 0, %s20
      %s23 = sphi 0, %s21
      %s24 = sphi 0, %s22
      %s25 = sphi 0, %s23
      %s35 = sphi 0, %s37
      %s38 = sphi 0, %s35
      %s39 = sphi 0, %s38
      %s55 = sphi 0, %s39
      %s63 = sphi 0, %s65
      %s66 = sphi 0, %s63
      %s67 = sphi 0, %s66
      %s83 = sphi 0, %s67
    $region4: #{tpu_custom_call.1} parent=1 // loop_header_branch
      %16 = sbr.rel (%p14) target = $region8
    $region5: #{tpu_custom_call.1} parent=1 // loop_body
      %s18 = ssub.s32 %s13, 1
      %s19 = ssub.s32 %s13, 2
      %s26 = sadd.s32 1, %s21
      %p27 = scmp.ge.s32.totalorder %s26, 1
      %s28 = scalar_select %p27, 0, %s26
      %s29 = sadd.s32 1, %s20
      %s30 = scalar_select %p27, %s29, %s20
      %p31 = scmp.ge.s32.totalorder %s30, 2
      %s32 = scalar_select %p31, 0, %s30
      %s33 = ssub.s32 %s20, %s32
      %p34 = scmp.eq.s32.totalorder %s33, 0
      %s36 = sadd.s32 %s35, 1
      %s37 = scalar_select %p34, %s35, %s36
      %p40 = pneg %p34
      %p41 = scmp.eq.s32.totalorder %s13, 1
      %p42 = por %p40, %p41
      %p43 = scmp.ne.s32.totalorder %s35, %s38
      %p44 = scmp.eq.s32.totalorder %s13, 0
      %p45 = por %p43, %p44
      %p46 = scmp.ne.s32.totalorder %s35, %s38
      %p47 = scmp.eq.s32.totalorder %s18, 1
      %p48 = por %p46, %p47
      %p49 = scmp.ne.s32.totalorder %s38, %s39
      %p50 = scmp.eq.s32.totalorder %s18, 0
      %p51 = por %p49, %p50
      %p52 = scmp.ne.s32.totalorder %s38, %s39
      %p53 = scmp.eq.s32.totalorder %s19, 1
      %p54 = por %p52, %p53
      %p56 = scmp.ne.s32.totalorder %s39, %s55
      %p57 = scmp.eq.s32.totalorder %s19, 0
      %p58 = por %p56, %p57
      %s59 = ssub.s32 %s20, %s32
      %s60 = ssub.s32 %s21, %s28
      %s61 = sor.u32 %s59, %s60
      %p62 = scmp.eq.s32.totalorder %s61, 0
      %s64 = sadd.s32 %s63, 1
      %s65 = scalar_select %p62, %s63, %s64
      %p68 = pneg %p62
      %p69 = scmp.eq.s32.totalorder %s13, 1
      %p70 = por %p68, %p69
      %p71 = scmp.ne.s32.totalorder %s63, %s66
      %p72 = scmp.eq.s32.totalorder %s13, 0
      %p73 = por %p71, %p72
      %p74 = scmp.ne.s32.totalorder %s63, %s66
      %p75 = scmp.eq.s32.totalorder %s18, 1
      %p76 = por %p74, %p75
      %p77 = scmp.ne.s32.totalorder %s66, %s67
      %p78 = scmp.eq.s32.totalorder %s18, 0
      %p79 = por %p77, %p78
      %p80 = scmp.ne.s32.totalorder %s66, %s67
      %p81 = scmp.eq.s32.totalorder %s19, 1
      %p82 = por %p80, %p81
      %p84 = scmp.ne.s32.totalorder %s67, %s83
      %p85 = scmp.eq.s32.totalorder %s19, 0
      %p86 = por %p84, %p85
      %p87 = scmp.le.s32.totalorder 1, %s13
      %p88 = scmp.lt.s32.totalorder %s13, 3
      %p89 = pnand %p87, %p88
      %p90 = pneg %p89
      // Predicated region
      $region9: #{tpu_custom_call.1} parent=5 // pred_check
        _
      $region10: #{tpu_custom_call.1} parent=5 // pred_check_branch
        %92 = sbr.rel (%p89) target = $region12
      $region11: #{tpu_custom_call.1} parent=5 // pred_region
        %s93 = ssub.s32 %s13, 1
      $region12: #{tpu_custom_call.1} parent=5 // pred_fallthru
        _
      %p94 = scmp.lt.s32.totalorder %s13, 2
      // Predicated region
      $region13: #{tpu_custom_call.1} parent=5 // pred_check
        %p95 = pneg %p94
      $region14: #{tpu_custom_call.1} parent=5 // pred_check_branch
        %97 = sbr.rel (%p95) target = $region16
      $region15: #{tpu_custom_call.1} parent=5 // pred_region
        // Predicated region
        $region17: #{tpu_custom_call.1} parent=15 // pred_check
          %p98 = pneg %p45
        $region18: #{tpu_custom_call.1} parent=15 // pred_check_branch
          %100 = sbr.rel (%p98) target = $region20
        $region19: #{tpu_custom_call.1} parent=15 // pred_region
          %s101 = sand.u32 %s35, 1
          %s102 = scalar_lea.sflag [#allocation3], %s101
          %s103 = sand.u32 %s35, 1
          %s104 = smul.addr %s103, 16
          %s105 = scalar_lea.vmem [#allocation2], %s104
          %s107 = ssub.s32 256, 256
          %108 = vsyncadd %s102, %s107
          %s109 = smul.addr %s20, 2
          %s110 = smul.addr %s109, 128
          %s111 = scalar_lea.hbm %s0, %s110
          %s112 = sshll.u32 %s105, 4
          %s113 = int_to_ptr.vmem [resolvable:$true] %s112
          %118 = dma.hbm_to_vmem [thread:$0]  %s111, 256, %s113, %s102, 128, 128, 8
        $region20: #{tpu_custom_call.1} parent=15 // pred_fallthru
          _
      $region16: #{tpu_custom_call.1} parent=5 // pred_fallthru
        _
      %p119 = scmp.le.s32.totalorder 1, %s13
      %p120 = scmp.lt.s32.totalorder %s13, 3
      %p121 = pnand %p119, %p120
      %p122 = pneg %p121
      // Predicated region
      $region21: #{tpu_custom_call.1} parent=5 // pred_check
        _
      $region22: #{tpu_custom_call.1} parent=5 // pred_check_branch
        %124 = sbr.rel (%p121) target = $region24
      $region23: #{tpu_custom_call.1} parent=5 // pred_region
        %s125 = ssub.s32 %s13, 1
        %s126 = sand.u32 %s38, 1
        %s127 = scalar_lea.sflag [#allocation3], %s126
        %s128 = sand.u32 %s38, 1
        %s129 = smul.addr %s128, 16
        %s130 = scalar_lea.vmem [#allocation2], %s129
        // Predicated region
        $region25: #{tpu_custom_call.1} parent=23 // pred_check
          %p131 = pneg %p51
        $region26: #{tpu_custom_call.1} parent=23 // pred_check_branch
          %133 = sbr.rel (%p131) target = $region28
        $region27: #{tpu_custom_call.1} parent=23 // pred_region
          %134 = dma.done %s127, 256
        $region28: #{tpu_custom_call.1} parent=23 // pred_fallthru
          _
        %s135 = sand.u32 %s38, 1
        %s136 = scalar_lea.sflag [#allocation3], %s135
        %s137 = sand.u32 %s38, 1
        %s138 = smul.addr %s137, 16
        %s139 = scalar_lea.vmem [#allocation2], %s138
        %p140 = pneg %p51
        %p141 = pneg %p48
        %p142 = pneg %p79
        %p143 = pneg %p76
        %s144 = sand.u32 %s66, 1
        %s145 = scalar_lea.sflag [#allocation4], %s144
        %s146 = sand.u32 %s66, 1
        %s147 = smul.addr %s146, 16
        %s148 = scalar_lea.vmem [#allocation5], %s147
        %s149 = smul.u32 2, %s23
        %v150 = vld [vmem:[%s130] sm:$0xff]
        %v151 = vld [vmem:[%s130 + $0x8] sm:$0xff]
        %v152 = vrot.slane %v150, 3
        %v153 = vrot.slane %v151, 3
        %v154 = vlaneseq
        %v155 = vshrl.u32 %v154, 7
        %vm156 = vcmp.lt.s32.totalorder %v155, 5
        %v157 = vsel %vm156, %v152, %v153
        %v158 = vsel %vm156, %v153, %v152
        %159 = vrot.lane.b32.xlu0 %v157, 104
        %v160 = vpop.permute.xlu0 %159
        %161 = vrot.lane.b32.xlu0 %v158, 104
        %v162 = vpop.permute.xlu0 %161
        %163 = vst [vmem:[%s148] sm:$0xff] %v160
        %164 = vst [vmem:[%s148 + $0x8] sm:$0xff] %v162
        %s165 = sand.u32 %s66, 1
        %s166 = scalar_lea.sflag [#allocation4], %s165
        %s167 = sand.u32 %s66, 1
        %s168 = smul.addr %s167, 16
        %s169 = scalar_lea.vmem [#allocation5], %s168
        // Predicated region
        $region29: #{tpu_custom_call.1} parent=23 // pred_check
          %p170 = pneg %p76
        $region30: #{tpu_custom_call.1} parent=23 // pred_check_branch
          %172 = sbr.rel (%p170) target = $region32
        $region31: #{tpu_custom_call.1} parent=23 // pred_region
          %s173 = smul.u32 2, %s23
          %s175 = ssub.s32 256, 256
          %176 = vsyncadd %s166, %s175
          %s177 = smul.addr %s22, 2
          %s178 = sadd.s32 %s173, %s177
          %s179 = smul.addr %s178, 128
          %s180 = scalar_lea.hbm %s1, %s179
          %s181 = sshll.u32 %s169, 4
          %s182 = int_to_ptr.vmem [resolvable:$true] %s181
          %187 = dma.vmem_to_hbm [thread:$0]  %s182, 256, %s180, %s166, 128, 128, 8
        $region32: #{tpu_custom_call.1} parent=23 // pred_fallthru
          _
      $region24: #{tpu_custom_call.1} parent=5 // pred_fallthru
        _
      %p188 = scmp.le.s32.totalorder 2, %s13
      // Predicated region
      $region33: #{tpu_custom_call.1} parent=5 // pred_check
        %p189 = pneg %p188
      $region34: #{tpu_custom_call.1} parent=5 // pred_check_branch
        %191 = sbr.rel (%p189) target = $region36
      $region35: #{tpu_custom_call.1} parent=5 // pred_region
        %s192 = ssub.s32 %s13, 2
        // Predicated region
        $region37: #{tpu_custom_call.1} parent=35 // pred_check
          %p193 = pneg %p82
        $region38: #{tpu_custom_call.1} parent=35 // pred_check_branch
          %195 = sbr.rel (%p193) target = $region40
        $region39: #{tpu_custom_call.1} parent=35 // pred_region
          %s196 = sand.u32 %s67, 1
          %s197 = scalar_lea.sflag [#allocation4], %s196
          %s198 = sand.u32 %s67, 1
          %s199 = smul.addr %s198, 16
          %s200 = scalar_lea.vmem [#allocation5], %s199
          %201 = dma.done %s197, 256
        $region40: #{tpu_custom_call.1} parent=35 // pred_fallthru
          _
      $region36: #{tpu_custom_call.1} parent=5 // pred_fallthru
        _
    $region6: #{tpu_custom_call.1} parent=1 // loop_footer
      %s17 = sadd.s32 1, %s13
    $region7: #{tpu_custom_call.1} parent=1 // loop_footer_branch
      %12 = sbr.rel target = $region3
    $region8: #{tpu_custom_call.1} parent=1 // loop_exit
      _
    %202 = vsyncpa [#allocation3], 1
    %s203 = scalar_lea.sflag [#allocation3], 1
    %204 = vsyncpa %s203, 1
    %205 = vsyncpa [#allocation4], 1
    %s206 = scalar_lea.sflag [#allocation4], 1
    %207 = vsyncpa %s206, 1

</llo_original>
